<compile_context>
chip_gen: v6e
topology: v6e:2x2x1
jax: 0.10.0
libtpu: 0.0.40
codegen_flags: <defaults>
</compile_context>

<pallas_src>
import functools

import jax
import jax.numpy as jnp
from jax.experimental import pallas as pl
from jax.experimental.pallas import tpu as pltpu

_LANES = 128
_SUBLANES = 8


def _dice_kernel(x_ref, t_ref, o_ref, num_acc, den_acc, *,
                 rows, block_rows, ignore_target):
    i = pl.program_id(0)

    @pl.when(i == 0)
    def _():
        num_acc[...] = jnp.zeros_like(num_acc)
        den_acc[...] = jnp.zeros_like(den_acc)

    # Native-dtype inputs; cast + sigmoid in-kernel (matches torch
    # `sigmoid(input)` / `target.float()`).
    x = x_ref[...].astype(jnp.float32)
    t = t_ref[...].astype(jnp.float32)
    sig = jax.nn.sigmoid(x)

    zero = jnp.float32(0.0)
    keep = t != jnp.float32(ignore_target)
    mn = jnp.where(keep, jnp.minimum(sig, t), zero)
    mx = jnp.where(keep, jnp.maximum(sig, t), zero)

    aligned = (block_rows % _SUBLANES) == 0          # static
    full_blocks = rows // block_rows                 # static
    has_edge = (rows % block_rows) != 0              # static

    def accumulate(mn_v, mx_v):
        if aligned:
            groups = block_rows // _SUBLANES
            num_acc[...] += jnp.sum(
                mn_v.reshape(groups, _SUBLANES, _LANES), axis=0)
            den_acc[...] += jnp.sum(
                mx_v.reshape(groups, _SUBLANES, _LANES), axis=0)
        else:
            # Only reachable for a single tiny full-array block whose row count
            # is not a multiple of 8; a masked sub-vreg RMW is fine there.
            num_acc[0:1, :] += jnp.sum(mn_v, axis=0, keepdims=True)
            den_acc[0:1, :] += jnp.sum(mx_v, axis=0, keepdims=True)

    if not has_edge:
        # Hot path: no iota, no index math, no overhang masking.
        accumulate(mn, mx)
    else:
        @pl.when(i < full_blocks)
        def _():
            accumulate(mn, mx)

        @pl.when(i >= full_blocks)
        def _():
            # Only the single overhanging last block pays for the row mask.
            row_ids = jax.lax.broadcasted_iota(
                jnp.int32, (block_rows, _LANES), 0)
            valid = (i * block_rows + row_ids) < rows
            accumulate(jnp.where(valid, mn, zero),
                       jnp.where(valid, mx, zero))

    @pl.when(i == pl.num_programs(0) - 1)
    def _():
        o_ref[0, :, :] = num_acc[...]
        o_ref[1, :, :] = den_acc[...]


def dice_loss(logits, target, ignore_target=-1, *, block_rows=8192):
    """Pallas DiceLoss forward. logits: any shape, target: same numel."""
    x = jnp.reshape(logits, (-1,))
    t = jnp.reshape(target, (-1,))
    n = x.shape[0]

    rows = n // _LANES
    n_main = rows * _LANES

    num = jnp.float32(0.0)
    den = jnp.float32(0.0)

    if rows > 0:
        if block_rows >= rows:
            blk = rows                                    # full-array block
        else:
            blk = max(_SUBLANES, (block_rows // _SUBLANES) * _SUBLANES)
        nblocks = -(-rows // blk)

        x2 = (x if n_main == n else x[:n_main]).reshape(rows, _LANES)
        t2 = (t if n_main == n else t[:n_main]).reshape(rows, _LANES)

        kernel = functools.partial(
            _dice_kernel,
            rows=rows,
            block_rows=blk,
            ignore_target=float(ignore_target),
        )

        partials = pl.pallas_call(
            kernel,
            out_shape=jax.ShapeDtypeStruct((2, _SUBLANES, _LANES), jnp.float32),
            grid_spec=pltpu.PrefetchScalarGridSpec(
                num_scalar_prefetch=0,
                grid=(nblocks,),
                in_specs=[
                    pl.BlockSpec((blk, _LANES), lambda i: (i, 0)),
                    pl.BlockSpec((blk, _LANES), lambda i: (i, 0)),
                ],
                out_specs=pl.BlockSpec((2, _SUBLANES, _LANES),
                                       lambda i: (0, 0, 0)),
                scratch_shapes=[
                    pltpu.VMEM((_SUBLANES, _LANES), jnp.float32),  # num acc
                    pltpu.VMEM((_SUBLANES, _LANES), jnp.float32),  # den acc
                ],
            ),
            compiler_params=pltpu.CompilerParams(
                dimension_semantics=("arbitrary",),
                # 2 inputs x 4 MiB x 2 buffers = 16 MiB at block_rows=8192
                # (f32); raise the scoped-VMEM cap so v5e's 16 MiB default
                # does not OOM while staying well under v7x's 64 MiB.
                vmem_limit_bytes=48 * 1024 * 1024,
            ),
        )(x2, t2)

        num = jnp.sum(partials[0])
        den = jnp.sum(partials[1])

    if n_main < n:
        # <128-element tail handled in plain JAX instead of a full-array pad.
        xt = x[n_main:].astype(jnp.float32)
        tt = t[n_main:].astype(jnp.float32)
        sig_t = jax.nn.sigmoid(xt)
        keep_t = (tt != jnp.float32(float(ignore_target))).astype(jnp.float32)
        num = num + jnp.sum(jnp.minimum(sig_t, tt) * keep_t)
        den = den + jnp.sum(jnp.maximum(sig_t, tt) * keep_t)

    den = jnp.maximum(den, jnp.float32(1.0))
    return jnp.float32(1.0) - num / den


def _reference(logits, target, ignore_target=-1):
    x = jax.nn.sigmoid(jnp.reshape(logits, (-1,)).astype(jnp.float32))
    t = jnp.reshape(target, (-1,)).astype(jnp.float32)
    mask = (t != ignore_target).astype(jnp.float32)
    num = jnp.sum(jnp.minimum(x, t) * mask)
    den = jnp.maximum(jnp.sum(jnp.maximum(x, t) * mask), 1.0)
    return 1.0 - num / den


def _make_inputs(key, n):
    k1, k2, k3 = jax.random.split(key, 3)
    logits = jax.random.normal(k1, (n,), dtype=jnp.float32)
    target = jax.random.bernoulli(k2, 0.5, (n,)).astype(jnp.int32)
    ignore_mask = jax.random.bernoulli(k3, 0.1, (n,))
    target = jnp.where(ignore_mask, -1, target)
    return logits, target


if __name__ == "__main__":
    key = jax.random.PRNGKey(0)
    ka, kb, kc = jax.random.split(key, 3)

    # Test 1: n not a multiple of 128 -> single full-array block + JAX tail.
    logits, target = _make_inputs(ka, 2000)
    loss = jax.block_until_ready(dice_loss(logits, target, ignore_target=-1))
    ref = _reference(logits, target, ignore_target=-1)
    assert jnp.allclose(loss, ref, atol=1e-5, rtol=1e-5), (loss, ref)

    # Test 2: force a multi-block grid with an overhanging (edge) last block.
    logits2, target2 = _make_inputs(kb, 3300)
    loss2 = jax.block_until_ready(
        dice_loss(logits2, target2, ignore_target=-1, block_rows=8))
    ref2 = _reference(logits2, target2, ignore_target=-1)
    assert jnp.allclose(loss2, ref2, atol=1e-5, rtol=1e-5), (loss2, ref2)

    # Test 3: lane-aligned n, evenly divisible blocks -> pure hot path, no tail.
    logits3, target3 = _make_inputs(kc, 4096)
    loss3 = jax.block_until_ready(
        dice_loss(logits3, target3, ignore_target=-1, block_rows=8))
    ref3 = _reference(logits3, target3, ignore_target=-1)
    assert jnp.allclose(loss3, ref3, atol=1e-5, rtol=1e-5), (loss3, ref3)

    print("KERNEL_OK")
</pallas_src>

<mosaic_0001>
module attributes {stable_mosaic.version = 11 : i64} {
  func.func @_dice_kernel(%arg0: i32, %arg1: memref<15x128xf32, #tpu.memory_space<vmem>>, %arg2: memref<15x128xi32, #tpu.memory_space<vmem>>, %arg3: memref<2x8x128xf32, #tpu.memory_space<vmem>>, %arg4: memref<8x128xf32, #tpu.memory_space<vmem>>, %arg5: memref<8x128xf32, #tpu.memory_space<vmem>>) attributes {dimension_semantics = [#tpu.dimension_semantics<arbitrary>], iteration_bounds = array<i64: 1>, scalar_prefetch = 0 : i64, scratch_operands = 2 : i64, tpu.core_type = #tpu.core_type<tc>, window_params = [{transform_indices = @transform_0, window_bounds = array<i64: 15, 128>}, {transform_indices = @transform_1, window_bounds = array<i64: 15, 128>}, {pipeline_mode = #tpu.pipeline_mode<synchronous>, transform_indices = @transform_2, window_bounds = array<i64: 2, 8, 128>}]} {
    %c0_i32 = arith.constant 0 : i32
    %0 = arith.cmpi eq, %arg0, %c0_i32 : i32
    %1 = arith.extui %0 : i1 to i32
    %c0_i32_0 = arith.constant 0 : i32
    %2 = arith.cmpi ne, %1, %c0_i32_0 : i32
    scf.if %2 {
      %cst_19 = arith.constant 0.000000e+00 : f32
      %32 = vector.broadcast %cst_19 : f32 to vector<8x128xf32>
      %c0_20 = arith.constant 0 : index
      %c0_21 = arith.constant 0 : index
      %33 = vector.load %arg4[%c0_20, %c0_21] : memref<8x128xf32, #tpu.memory_space<vmem>>, vector<8x128xf32>
      tpu.vector_store %arg4[%c0_20, %c0_21], %32 {strides = array<i32>} : memref<8x128xf32, #tpu.memory_space<vmem>>, vector<8x128xf32>,
      %cst_22 = arith.constant 0.000000e+00 : f32
      %34 = vector.broadcast %cst_22 : f32 to vector<8x128xf32>
      %c0_23 = arith.constant 0 : index
      %c0_24 = arith.constant 0 : index
      %35 = vector.load %arg5[%c0_23, %c0_24] : memref<8x128xf32, #tpu.memory_space<vmem>>, vector<8x128xf32>
      tpu.vector_store %arg5[%c0_23, %c0_24], %34 {strides = array<i32>} : memref<8x128xf32, #tpu.memory_space<vmem>>, vector<8x128xf32>,
    } else {
    }
    %c0 = arith.constant 0 : index
    %c0_1 = arith.constant 0 : index
    %3 = vector.load %arg1[%c0, %c0_1] : memref<15x128xf32, #tpu.memory_space<vmem>>, vector<15x128xf32>
    %c0_2 = arith.constant 0 : index
    %c0_3 = arith.constant 0 : index
    %4 = vector.load %arg2[%c0_2, %c0_3] : memref<15x128xi32, #tpu.memory_space<vmem>>, vector<15x128xi32>
    %5 = arith.sitofp %4 : vector<15x128xi32> to vector<15x128xf32>
    %6 = arith.negf %3 : vector<15x128xf32>
    %7 = math.exp %6 : vector<15x128xf32>
    %cst = arith.constant 1.000000e+00 : f32
    %8 = vector.broadcast %cst : f32 to vector<15x128xf32>
    %9 = arith.addf %8, %7 : vector<15x128xf32>
    %10 = arith.divf %8, %9 : vector<15x128xf32>
    %cst_4 = arith.constant -1.000000e+00 : f32
    %11 = vector.broadcast %cst_4 : f32 to vector<15x128xf32>
    %12 = arith.cmpf one, %5, %11 : vector<15x128xf32>
    %13 = arith.minimumf %10, %5 : vector<15x128xf32>
    %cst_5 = arith.constant 0.000000e+00 : f32
    %14 = vector.broadcast %cst_5 : f32 to vector<15x128xf32>
    %15 = arith.select %12, %13, %14 : vector<15x128xi1>, vector<15x128xf32>
    %16 = arith.maximumf %10, %5 : vector<15x128xf32>
    %cst_6 = arith.constant 0.000000e+00 : f32
    %17 = vector.broadcast %cst_6 : f32 to vector<15x128xf32>
    %18 = arith.select %12, %16, %17 : vector<15x128xi1>, vector<15x128xf32>
    %c0_7 = arith.constant 0 : index
    %c0_8 = arith.constant 0 : index
    %19 = vector.load %arg4[%c0_7, %c0_8] : memref<8x128xf32, #tpu.memory_space<vmem>>, vector<1x128xf32>
    %cst_9 = arith.constant dense<0.000000e+00> : vector<128xf32>
    %20 = vector.multi_reduction <add>, %15, %cst_9 [0] : vector<15x128xf32> to vector<128xf32>
    %21 = vector.shape_cast %20 : vector<128xf32> to vector<1x128xf32>
    %22 = arith.addf %19, %21 : vector<1x128xf32>
    %c0_10 = arith.constant 0 : index
    %c0_11 = arith.constant 0 : index
    %23 = vector.load %arg4[%c0_10, %c0_11] : memref<8x128xf32, #tpu.memory_space<vmem>>, vector<1x128xf32>
    tpu.vector_store %arg4[%c0_10, %c0_11], %22 {strides = array<i32>} : memref<8x128xf32, #tpu.memory_space<vmem>>, vector<1x128xf32>,
    %c0_12 = arith.constant 0 : index
    %c0_13 = arith.constant 0 : index
    %24 = vector.load %arg5[%c0_12, %c0_13] : memref<8x128xf32, #tpu.memory_space<vmem>>, vector<1x128xf32>
    %cst_14 = arith.constant dense<0.000000e+00> : vector<128xf32>
    %25 = vector.multi_reduction <add>, %18, %cst_14 [0] : vector<15x128xf32> to vector<128xf32>
    %26 = vector.shape_cast %25 : vector<128xf32> to vector<1x128xf32>
    %27 = arith.addf %24, %26 : vector<1x128xf32>
    %c0_15 = arith.constant 0 : index
    %c0_16 = arith.constant 0 : index
    %28 = vector.load %arg5[%c0_15, %c0_16] : memref<8x128xf32, #tpu.memory_space<vmem>>, vector<1x128xf32>
    tpu.vector_store %arg5[%c0_15, %c0_16], %27 {strides = array<i32>} : memref<8x128xf32, #tpu.memory_space<vmem>>, vector<1x128xf32>,
    %c0_i32_17 = arith.constant 0 : i32
    %29 = arith.cmpi eq, %arg0, %c0_i32_17 : i32
    %30 = arith.extui %29 : i1 to i32
    %c0_i32_18 = arith.constant 0 : i32
    %31 = arith.cmpi ne, %30, %c0_i32_18 : i32
    scf.if %31 {
      %c0_19 = arith.constant 0 : index
      %c0_20 = arith.constant 0 : index
      %32 = vector.load %arg4[%c0_19, %c0_20] : memref<8x128xf32, #tpu.memory_space<vmem>>, vector<8x128xf32>
      %c0_21 = arith.constant 0 : index
      %c0_22 = arith.constant 0 : index
      %c0_23 = arith.constant 0 : index
      %33 = vector.load %arg3[%c0_21, %c0_22, %c0_23] : memref<2x8x128xf32, #tpu.memory_space<vmem>>, vector<1x8x128xf32>
      %34 = vector.shape_cast %33 : vector<1x8x128xf32> to vector<8x128xf32>
      %35 = vector.shape_cast %32 : vector<8x128xf32> to vector<1x8x128xf32>
      tpu.vector_store %arg3[%c0_21, %c0_22, %c0_23], %35 {strides = array<i32>} : memref<2x8x128xf32, #tpu.memory_space<vmem>>, vector<1x8x128xf32>,
      %c0_24 = arith.constant 0 : index
      %c0_25 = arith.constant 0 : index
      %36 = vector.load %arg5[%c0_24, %c0_25] : memref<8x128xf32, #tpu.memory_space<vmem>>, vector<8x128xf32>
      %c1 = arith.constant 1 : index
      %c0_26 = arith.constant 0 : index
      %c0_27 = arith.constant 0 : index
      %37 = vector.load %arg3[%c1, %c0_26, %c0_27] : memref<2x8x128xf32, #tpu.memory_space<vmem>>, vector<1x8x128xf32>
      %38 = vector.shape_cast %37 : vector<1x8x128xf32> to vector<8x128xf32>
      %39 = vector.shape_cast %36 : vector<8x128xf32> to vector<1x8x128xf32>
      tpu.vector_store %arg3[%c1, %c0_26, %c0_27], %39 {strides = array<i32>} : memref<2x8x128xf32, #tpu.memory_space<vmem>>, vector<1x8x128xf32>,
    } else {
    }
    return
  }
  func.func @transform_0(%arg0: i32) -> (i32, i32) {
    %c0_i32 = arith.constant 0 : i32
    %c0_i32_0 = arith.constant 0 : i32
    return %arg0, %c0_i32 : i32, i32
  }
  func.func @transform_1(%arg0: i32) -> (i32, i32) {
    %c0_i32 = arith.constant 0 : i32
    %c0_i32_0 = arith.constant 0 : i32
    return %arg0, %c0_i32 : i32, i32
  }
  func.func @transform_2(%arg0: i32) -> (i32, i32, i32) {
    %c0_i32 = arith.constant 0 : i32
    %c0_i32_0 = arith.constant 0 : i32
    %c0_i32_1 = arith.constant 0 : i32
    %c0_i32_2 = arith.constant 0 : i32
    return %c0_i32, %c0_i32_0, %c0_i32_1 : i32, i32, i32
  }
}

</mosaic_0001>

<llo_original>
// kernel: tpu_custom_call.1
$region0: #{tpu_custom_call.1}
  #allocation0 [shape = 'u32[]', space=smem, size = 0x4, offset = 0x4, fixed_abs, tag = 'smem constant byte address 0x4 - core index']
  #allocation1 [shape = 'u32[144,128]{1,0:T(1,128)}', space=vmem, size = 0x12000, scoped, tag = 'internal scratch']
  #allocation2 [shape = 'f32[8,128]{1,0:T(8,128)}', space=vmem, size = 0x1000, scoped, tag = 'scratch operand']
  #allocation3 [shape = 'f32[8,128]{1,0:T(8,128)}', space=vmem, size = 0x1000, scoped, tag = 'scratch operand']
  %s0 = inlined_call_operand.hbm [shape: f32[15,128], index: 0, kind: input, shape index: {}]
  %s1 = inlined_call_operand.hbm [shape: s32[15,128], index: 1, kind: input, shape index: {}]
  %s2 = inlined_call_operand.hbm [shape: f32[2,8,128], index: 2, kind: output, shape index: {}]
  %s3 = sld [smem:[#allocation0]]
  $region34: #{tpu_custom_call.1} parent=0
    _
  %s5 = ssub.s32 1, %s3
  %s6 = scalar_select 0, %s5, %s3
  $region1: #{tpu_custom_call.1} parent=0
    #allocation4 [shape = 'u8[8192]{0}', space=vmem, size = 0x2000, scoped, tag = 'input window, operand 0, single buffered']
    #allocation5 [shape = 's32[1]{0}', space=sflag, size = 0x4, scoped, tag = 'scoped memory for tpu_custom_call.1']
    #allocation6 [shape = 's32[1]{0}', space=sflag, size = 0x4, scoped, tag = 'scoped memory for tpu_custom_call.1']
    #allocation7 [shape = 'u8[8192]{0}', space=vmem, size = 0x2000, scoped, tag = 'input window, operand 1, single buffered']
    #allocation8 [shape = 's32[1]{0}', space=sflag, size = 0x4, scoped, tag = 'scoped memory for tpu_custom_call.1']
    #allocation9 [shape = 'u8[8192]{0}', space=vmem, size = 0x2000, scoped, tag = 'output window, operand 0, single buffered']
    %7 = vsyncpa [#allocation5], 0
    %8 = vsyncpa [#allocation8], 0
    %9 = vsyncpa [#allocation6], 0
    // Predicated region
    $region2: #{tpu_custom_call.1} parent=1 // pred_check
      _
    $region3: #{tpu_custom_call.1} parent=1 // pred_check_branch
      %11 = sbr.rel (0) target = $region5
    $region4: #{tpu_custom_call.1} parent=1 // pred_region
      %s13 = ssub.s32 256, 256
      %14 = vsyncadd [#allocation5], %s13
      %s15 = sshll.u32 [#allocation4], 4
      %s16 = int_to_ptr.vmem [resolvable:$true] %s15
      %21 = dma.hbm_to_vmem [thread:$0]  %s0, 256, %s16, [#allocation5], 128, 128, 8
    $region5: #{tpu_custom_call.1} parent=1 // pred_fallthru
      _
    // Predicated region
    $region6: #{tpu_custom_call.1} parent=1 // pred_check
      _
    $region7: #{tpu_custom_call.1} parent=1 // pred_check_branch
      %23 = sbr.rel (0) target = $region9
    $region8: #{tpu_custom_call.1} parent=1 // pred_region
      %s25 = ssub.s32 256, 256
      %26 = vsyncadd [#allocation8], %s25
      %s27 = sshll.u32 [#allocation7], 4
      %s28 = int_to_ptr.vmem [resolvable:$true] %s27
      %33 = dma.hbm_to_vmem [thread:$0]  %s1, 256, %s28, [#allocation8], 128, 128, 8
    $region9: #{tpu_custom_call.1} parent=1 // pred_fallthru
      _
    // Predicated region
    $region10: #{tpu_custom_call.1} parent=1 // pred_check
      _
    $region11: #{tpu_custom_call.1} parent=1 // pred_check_branch
      %35 = sbr.rel (0) target = $region13
    $region12: #{tpu_custom_call.1} parent=1 // pred_region
      %36 = dma.done [#allocation5], 256
    $region13: #{tpu_custom_call.1} parent=1 // pred_fallthru
      _
    // Predicated region
    $region14: #{tpu_custom_call.1} parent=1 // pred_check
      _
    $region15: #{tpu_custom_call.1} parent=1 // pred_check_branch
      %38 = sbr.rel (0) target = $region17
    $region16: #{tpu_custom_call.1} parent=1 // pred_region
      %39 = dma.done [#allocation8], 256
    $region17: #{tpu_custom_call.1} parent=1 // pred_fallthru
      _
    %p40 = scmp.eq.s32.totalorder 0, 0
    // Predicated region
    $region18: #{tpu_custom_call.1} parent=1 // pred_check
      %p41 = pneg %p40
    $region19: #{tpu_custom_call.1} parent=1 // pred_check_branch
      %43 = sbr.rel (%p41) target = $region21
    $region20: #{tpu_custom_call.1} parent=1 // pred_region
      %44 = vst [vmem:[#allocation2] sm:$0xff] 0.0
      %45 = vst [vmem:[#allocation3] sm:$0xff] 0.0
    $region21: #{tpu_custom_call.1} parent=1 // pred_fallthru
      _
    %v46 = vld [vmem:[#allocation4] sm:$0xff]
    %v47 = vld [vmem:[#allocation4 + $0x8] sm:$0x7f]
    %v48 = vld [vmem:[#allocation7] sm:$0xff]
    %v49 = vld [vmem:[#allocation7 + $0x8] sm:$0x7f]
    %v50 = vcvt.s32.f32 %v48
    %v51 = vcvt.s32.f32 %v49
    %v52 = vxor.u32 %v46, 2147483648
    %v53 = vxor.u32 %v47, 2147483648
    %v54 = vmul.f32 %v52, 1.442695
    %v55 = vpow.pop %v54
    %v56 = vmul.f32 %v53, 1.442695
    %v57 = vpow.pop %v56
    %v58 = vadd.f32 %v55, 1.0
    %v59 = vadd.f32 %v57, 1.0
    %v60 = vrcp.pop %v58
    %v61 = vmul.f32 1.0, %v60
    %v62 = vrcp.pop %v59
    %v63 = vmul.f32 1.0, %v62
    %vm64 = vcmp.ne.f32.partialorder %v50, -1.0
    %vm65 = vcmp.ne.f32.partialorder %v51, -1.0
    %v66 = vmin.f32 %v61, %v50
    %v67 = vmin.f32 %v63, %v51
    %v68 = vsel %vm64, %v66, 0.0
    %v69 = vsel %vm65, %v67, 0.0
    %v70 = vmax.f32 %v61, %v50
    %v71 = vmax.f32 %v63, %v51
    %v72 = vsel %vm64, %v70, 0.0
    %v73 = vsel %vm65, %v71, 0.0
    %v74 = vld [vmem:[#allocation2] sm:$0x1]
    %vm75 = vcmask 1046528
    %v76 = vsel %vm75, %v69, 0.0
    %v77 = vadd.f32 %v68, %v76
    %v78 = vrot.slane %v77, 4
    %v79 = vadd.f32 %v77, %v78
    %v80 = vrot.slane %v79, 2
    %v81 = vadd.f32 %v79, %v80
    %v82 = vrot.slane %v81, 1
    %v83 = vadd.f32 %v81, %v82
    %v84 = vadd.f32 %v74, %v83
    %85 = vst [vmem:[#allocation2] sm:$0x1] %v84
    %v86 = vld [vmem:[#allocation3] sm:$0x1]
    %v87 = vsel %vm75, %v73, 0.0
    %v88 = vadd.f32 %v72, %v87
    %v89 = vrot.slane %v88, 4
    %v90 = vadd.f32 %v88, %v89
    %v91 = vrot.slane %v90, 2
    %v92 = vadd.f32 %v90, %v91
    %v93 = vrot.slane %v92, 1
    %v94 = vadd.f32 %v92, %v93
    %v95 = vadd.f32 %v86, %v94
    %96 = vst [vmem:[#allocation3] sm:$0x1] %v95
    // Predicated region
    $region22: #{tpu_custom_call.1} parent=1 // pred_check
      %p97 = pneg %p40
    $region23: #{tpu_custom_call.1} parent=1 // pred_check_branch
      %99 = sbr.rel (%p97) target = $region25
    $region24: #{tpu_custom_call.1} parent=1 // pred_region
      %v100 = vld [vmem:[#allocation2] sm:$0xff]
      %101 = vst [vmem:[#allocation9] sm:$0xff] %v100
      %v102 = vld [vmem:[#allocation3] sm:$0xff]
      %s103 = scalar_lea.vmem [#allocation9], 8
      %104 = vst [vmem:[%s103] sm:$0xff] %v102
    $region25: #{tpu_custom_call.1} parent=1 // pred_fallthru
      _
    // Predicated region
    $region26: #{tpu_custom_call.1} parent=1 // pred_check
      _
    $region27: #{tpu_custom_call.1} parent=1 // pred_check_branch
      %106 = sbr.rel (0) target = $region29
    $region28: #{tpu_custom_call.1} parent=1 // pred_region
      %s108 = ssub.s32 256, 256
      %109 = vsyncadd [#allocation6], %s108
      %s110 = sshll.u32 [#allocation9], 4
      %s111 = int_to_ptr.vmem [resolvable:$true] %s110
      %116 = dma.vmem_to_hbm [thread:$0]  %s111, 256, %s2, [#allocation6], 128, 128, 8
    $region29: #{tpu_custom_call.1} parent=1 // pred_fallthru
      _
    // Predicated region
    $region30: #{tpu_custom_call.1} parent=1 // pred_check
      _
    $region31: #{tpu_custom_call.1} parent=1 // pred_check_branch
      %118 = sbr.rel (0) target = $region33
    $region32: #{tpu_custom_call.1} parent=1 // pred_region
      %119 = dma.done [#allocation6], 256
    $region33: #{tpu_custom_call.1} parent=1 // pred_fallthru
      _
    %120 = vsyncpa [#allocation5], 1
    %121 = vsyncpa [#allocation8], 1
    %122 = vsyncpa [#allocation6], 1

</llo_original>
